<compile_context>
chip_gen: v5e
topology: v5e:2x2
jax: 0.10.0
libtpu: 0.0.40
codegen_flags: <defaults>
</compile_context>

<pallas_src>
import jax
import jax.numpy as jnp
from jax.experimental import pallas as pl
from jax.experimental.pallas import tpu as pltpu


def _round_up(x, m):
    return ((x + m - 1) // m) * m


def _cdiv(a, b):
    return -(-a // b)


def _make_kl_kernel(n_valid, tile_rows, lanes, blocks_per_slice, needs_mask):
    def kernel(mean_ref, logv_ref, out_ref, acc_ref):
        i = pl.program_id(1)  # reduction step within this slice

        @pl.when(i == 0)
        def _():
            acc_ref[...] = jnp.zeros_like(acc_ref)

        m = mean_ref[...].astype(jnp.float32)
        lv = logv_ref[...].astype(jnp.float32)
        # 1 + logv - mean^2 - exp(logv)
        term = 1.0 + lv - m * m - jnp.exp(lv)

        if needs_mask:
            # Logical (unclamped) block index of this tile; any element whose
            # flat index falls at/after n_valid is padding (or a duplicated
            # read coming from a clamped index_map) -> zero its contribution.
            blk = pl.program_id(0) * blocks_per_slice + i
            row = jax.lax.broadcasted_iota(jnp.int32, term.shape, 0)
            lane = jax.lax.broadcasted_iota(jnp.int32, term.shape, 1)
            flat_idx = (blk * tile_rows + row) * lanes + lane
            term = jnp.where(flat_idx < n_valid, term, 0.0)

        # Fold the (tile_rows, lanes) tile into the (8, lanes) accumulator.
        # tile_rows is a multiple of 8, so the reshape stays on native (8,128)
        # tile boundaries and the axis-0 reduce is plain VALU adds (no XLU,
        # no per-step scalar dependency chain).
        acc_ref[...] += jnp.sum(term.reshape(-1, 8, lanes), axis=0)

        # Emit this slice's partial only on its last reduction step.
        @pl.when(i == pl.num_programs(1) - 1)
        def _():
            out_ref[...] = acc_ref[...]

    return kernel


def kl_loss_standard(mean, logv, *, tile_rows=4096, lanes=128, num_slices=2):
    """Pallas equivalent of _KL_LOSS_STANDARD.forward(mean, logv)."""
    assert mean.shape == logv.shape
    n = mean.size
    assert n > 0

    flat_m = jnp.ravel(mean)
    flat_lv = jnp.ravel(logv)

    # Pad (tiny, and only when needed) so the flat length is lane-aligned.
    # The fill value is irrelevant: padded elements are masked in-kernel.
    pad = (-n) % lanes
    if pad:
        flat_m = jnp.pad(flat_m, (0, pad))
        flat_lv = jnp.pad(flat_lv, (0, pad))
    rows = (n + pad) // lanes

    # Sublane packing for the input dtype: 8 rows (4-byte), 16 (2-byte), 32 (1-byte).
    itemsize = jnp.dtype(mean.dtype).itemsize
    sub = max(8, 32 // max(itemsize, 1))
    tile_rows = max(sub, (tile_rows // sub) * sub)      # multiple of packing (>= 8)
    tile_rows = min(tile_rows, _round_up(rows, sub))    # don't exceed the data

    total_blocks = _cdiv(rows, tile_rows)
    num_slices = max(1, min(num_slices, total_blocks))
    blocks_per_slice = _cdiv(total_blocks, num_slices)

    covered = num_slices * blocks_per_slice * tile_rows * lanes
    needs_mask = covered != n

    if num_slices * blocks_per_slice == total_blocks:
        def in_index_map(c, i):
            return (c * blocks_per_slice + i, 0)
    else:
        # Uneven split: clamp so the block index never points past the data;
        # duplicated reads are zeroed by the in-kernel mask.
        last_block = total_blocks - 1

        def in_index_map(c, i):
            return (jnp.minimum(c * blocks_per_slice + i, last_block), 0)

    m2 = flat_m.reshape(rows, lanes)
    lv2 = flat_lv.reshape(rows, lanes)

    kernel = _make_kl_kernel(n, tile_rows, lanes, blocks_per_slice, needs_mask)

    partials = pl.pallas_call(
        kernel,
        out_shape=jax.ShapeDtypeStruct((num_slices * 8, lanes), jnp.float32),
        grid_spec=pltpu.PrefetchScalarGridSpec(
            num_scalar_prefetch=0,
            grid=(num_slices, blocks_per_slice),
            in_specs=[
                pl.BlockSpec((tile_rows, lanes), in_index_map),
                pl.BlockSpec((tile_rows, lanes), in_index_map),
            ],
            out_specs=pl.BlockSpec((8, lanes), lambda c, i: (c, 0)),
            scratch_shapes=[pltpu.VMEM((8, lanes), jnp.float32)],
        ),
        compiler_params=pltpu.CompilerParams(
            # Slice axis can be sharded across TensorCores (v7x megacore);
            # inner axis is the sequential reduction into the accumulator.
            dimension_semantics=("parallel", "arbitrary"),
        ),
    )(m2, lv2)

    # Final (tiny) cross-lane/sublane reduce + -0.5 scale outside the kernel.
    return -0.5 * jnp.sum(partials)


if __name__ == "__main__":
    key = jax.random.PRNGKey(0)
    k_mean, k_logv = jax.random.split(key)

    # Typical VAE latent shape (batch=8, hidden=32); module has no parameters.
    mean = jax.random.normal(k_mean, (8, 32), dtype=jnp.float32)
    logv = jax.random.normal(k_logv, (8, 32), dtype=jnp.float32) * 0.5

    loss = jax.block_until_ready(kl_loss_standard(mean, logv))
    ref = -0.5 * jnp.sum(1.0 + logv - mean**2 - jnp.exp(logv))
    assert jnp.allclose(loss, ref, rtol=1e-5, atol=1e-5), (loss, ref)

    # Extra check: non-lane-aligned size exercises the small-pad + mask path.
    k2m, k2v = jax.random.split(jax.random.PRNGKey(1))
    mean2 = jax.random.normal(k2m, (5, 37), dtype=jnp.float32)
    logv2 = jax.random.normal(k2v, (5, 37), dtype=jnp.float32) * 0.5
    loss2 = jax.block_until_ready(kl_loss_standard(mean2, logv2))
    ref2 = -0.5 * jnp.sum(1.0 + logv2 - mean2**2 - jnp.exp(logv2))
    assert jnp.allclose(loss2, ref2, rtol=1e-5, atol=1e-5), (loss2, ref2)

    print("KERNEL_OK")
</pallas_src>

<mosaic_0001>
module attributes {stable_mosaic.version = 11 : i64} {
  func.func @kernel(%arg0: i32, %arg1: i32, %arg2: memref<8x128xf32, #tpu.memory_space<vmem>>, %arg3: memref<8x128xf32, #tpu.memory_space<vmem>>, %arg4: memref<8x128xf32, #tpu.memory_space<vmem>>, %arg5: memref<8x128xf32, #tpu.memory_space<vmem>>) attributes {dimension_semantics = [#tpu.dimension_semantics<parallel>, #tpu.dimension_semantics<arbitrary>], iteration_bounds = array<i64: 1, 1>, scalar_prefetch = 0 : i64, scratch_operands = 1 : i64, tpu.core_type = #tpu.core_type<tc>, window_params = [{transform_indices = @transform_0, window_bounds = array<i64: 8, 128>}, {transform_indices = @transform_1, window_bounds = array<i64: 8, 128>}, {transform_indices = @transform_2, window_bounds = array<i64: 8, 128>}]} {
    %c0_i32 = arith.constant 0 : i32
    %0 = arith.cmpi eq, %arg1, %c0_i32 : i32
    %1 = arith.extui %0 : i1 to i32
    %c0_i32_0 = arith.constant 0 : i32
    %2 = arith.cmpi ne, %1, %c0_i32_0 : i32
    scf.if %2 {
      %cst_12 = arith.constant 0.000000e+00 : f32
      %33 = vector.broadcast %cst_12 : f32 to vector<8x128xf32>
      %c0_13 = arith.constant 0 : index
      %c0_14 = arith.constant 0 : index
      %34 = vector.load %arg5[%c0_13, %c0_14] : memref<8x128xf32, #tpu.memory_space<vmem>>, vector<8x128xf32>
      tpu.vector_store %arg5[%c0_13, %c0_14], %33 {strides = array<i32>} : memref<8x128xf32, #tpu.memory_space<vmem>>, vector<8x128xf32>,
    } else {
    }
    %c0 = arith.constant 0 : index
    %c0_1 = arith.constant 0 : index
    %3 = vector.load %arg2[%c0, %c0_1] : memref<8x128xf32, #tpu.memory_space<vmem>>, vector<8x128xf32>
    %c0_2 = arith.constant 0 : index
    %c0_3 = arith.constant 0 : index
    %4 = vector.load %arg3[%c0_2, %c0_3] : memref<8x128xf32, #tpu.memory_space<vmem>>, vector<8x128xf32>
    %cst = arith.constant 1.000000e+00 : f32
    %5 = vector.broadcast %cst : f32 to vector<8x128xf32>
    %6 = arith.addf %5, %4 : vector<8x128xf32>
    %7 = arith.mulf %3, %3 : vector<8x128xf32>
    %8 = arith.subf %6, %7 : vector<8x128xf32>
    %9 = math.exp %4 : vector<8x128xf32>
    %10 = arith.subf %8, %9 : vector<8x128xf32>
    %c1_i32 = arith.constant 1 : i32
    %11 = arith.muli %arg0, %c1_i32 : i32
    %12 = arith.addi %11, %arg1 : i32
    %13 = tpu.iota {dimensions = array<i32: 0>} : vector<8x128xi32>
    %14 = tpu.iota {dimensions = array<i32: 1>} : vector<8x128xi32>
    %c8_i32 = arith.constant 8 : i32
    %15 = arith.muli %12, %c8_i32 : i32
    %16 = vector.broadcast %15 : i32 to vector<8x128xi32>
    %17 = arith.addi %16, %13 : vector<8x128xi32>
    %c128_i32 = arith.constant 128 : i32
    %18 = vector.broadcast %c128_i32 : i32 to vector<8x128xi32>
    %19 = arith.muli %17, %18 : vector<8x128xi32>
    %20 = arith.addi %19, %14 : vector<8x128xi32>
    %c256_i32 = arith.constant 256 : i32
    %21 = vector.broadcast %c256_i32 : i32 to vector<8x128xi32>
    %22 = arith.cmpi slt, %20, %21 : vector<8x128xi32>
    %cst_4 = arith.constant 0.000000e+00 : f32
    %23 = vector.broadcast %cst_4 : f32 to vector<8x128xf32>
    %24 = arith.select %22, %10, %23 : vector<8x128xi1>, vector<8x128xf32>
    %c0_5 = arith.constant 0 : index
    %c0_6 = arith.constant 0 : index
    %25 = vector.load %arg5[%c0_5, %c0_6] : memref<8x128xf32, #tpu.memory_space<vmem>>, vector<8x128xf32>
    %26 = vector.shape_cast %24 : vector<8x128xf32> to vector<1x8x128xf32>
    %cst_7 = arith.constant dense<0.000000e+00> : vector<8x128xf32>
    %27 = vector.multi_reduction <add>, %26, %cst_7 [0] : vector<1x8x128xf32> to vector<8x128xf32>
    %28 = arith.addf %25, %27 : vector<8x128xf32>
    %c0_8 = arith.constant 0 : index
    %c0_9 = arith.constant 0 : index
    %29 = vector.load %arg5[%c0_8, %c0_9] : memref<8x128xf32, #tpu.memory_space<vmem>>, vector<8x128xf32>
    tpu.vector_store %arg5[%c0_8, %c0_9], %28 {strides = array<i32>} : memref<8x128xf32, #tpu.memory_space<vmem>>, vector<8x128xf32>,
    %c0_i32_10 = arith.constant 0 : i32
    %30 = arith.cmpi eq, %arg1, %c0_i32_10 : i32
    %31 = arith.extui %30 : i1 to i32
    %c0_i32_11 = arith.constant 0 : i32
    %32 = arith.cmpi ne, %31, %c0_i32_11 : i32
    scf.if %32 {
      %c0_12 = arith.constant 0 : index
      %c0_13 = arith.constant 0 : index
      %33 = vector.load %arg5[%c0_12, %c0_13] : memref<8x128xf32, #tpu.memory_space<vmem>>, vector<8x128xf32>
      %c0_14 = arith.constant 0 : index
      %c0_15 = arith.constant 0 : index
      %34 = vector.load %arg4[%c0_14, %c0_15] : memref<8x128xf32, #tpu.memory_space<vmem>>, vector<8x128xf32>
      tpu.vector_store %arg4[%c0_14, %c0_15], %33 {strides = array<i32>} : memref<8x128xf32, #tpu.memory_space<vmem>>, vector<8x128xf32>,
    } else {
    }
    return
  }
  func.func @transform_0(%arg0: i32, %arg1: i32) -> (i32, i32) {
    %c1_i32 = arith.constant 1 : i32
    %0 = arith.muli %arg0, %c1_i32 : i32
    %1 = arith.addi %0, %arg1 : i32
    %c0_i32 = arith.constant 0 : i32
    %c0_i32_0 = arith.constant 0 : i32
    return %1, %c0_i32 : i32, i32
  }
  func.func @transform_1(%arg0: i32, %arg1: i32) -> (i32, i32) {
    %c1_i32 = arith.constant 1 : i32
    %0 = arith.muli %arg0, %c1_i32 : i32
    %1 = arith.addi %0, %arg1 : i32
    %c0_i32 = arith.constant 0 : i32
    %c0_i32_0 = arith.constant 0 : i32
    return %1, %c0_i32 : i32, i32
  }
  func.func @transform_2(%arg0: i32, %arg1: i32) -> (i32, i32) {
    %c0_i32 = arith.constant 0 : i32
    %c0_i32_0 = arith.constant 0 : i32
    return %arg0, %c0_i32 : i32, i32
  }
}

</mosaic_0001>

<llo_original>
// kernel: tpu_custom_call.1
$region0: #{tpu_custom_call.1}
  #allocation0 [shape = 'u32[]', space=smem, size = 0x4, offset = 0x4, fixed_abs, tag = 'smem constant byte address 0x4 - core index']
  #allocation1 [shape = 'u32[72,128]{1,0:T(1,128)}', space=vmem, size = 0x9000, scoped, tag = 'internal scratch']
  #allocation2 [shape = 'f32[8,128]{1,0:T(8,128)}', space=vmem, size = 0x1000, scoped, tag = 'scratch operand']
  %s0 = inlined_call_operand.hbm [shape: f32[2,128], index: 0, kind: input, shape index: {}]
  %s1 = inlined_call_operand.hbm [shape: f32[2,128], index: 1, kind: input, shape index: {}]
  %s2 = inlined_call_operand.hbm [shape: f32[8,128], index: 2, kind: output, shape index: {}]
  %s3 = sld [smem:[#allocation0]]
  $region34: #{tpu_custom_call.1} parent=0
    _
  %s5 = ssub.s32 1, %s3
  %s6 = scalar_select 0, %s5, %s3
  $region1: #{tpu_custom_call.1} parent=0
    #allocation3 [shape = 'u8[4096]{0}', space=vmem, size = 0x1000, scoped, tag = 'input window, operand 0, single buffered']
    #allocation4 [shape = 's32[1]{0}', space=sflag, size = 0x4, scoped, tag = 'scoped memory for tpu_custom_call.1']
    #allocation5 [shape = 's32[1]{0}', space=sflag, size = 0x4, scoped, tag = 'scoped memory for tpu_custom_call.1']
    #allocation6 [shape = 'u8[4096]{0}', space=vmem, size = 0x1000, scoped, tag = 'input window, operand 1, single buffered']
    #allocation7 [shape = 's32[1]{0}', space=sflag, size = 0x4, scoped, tag = 'scoped memory for tpu_custom_call.1']
    #allocation8 [shape = 'u8[4096]{0}', space=vmem, size = 0x1000, scoped, tag = 'output window, operand 0, single buffered']
    %7 = vsyncpa [#allocation4], 0
    %8 = vsyncpa [#allocation7], 0
    %9 = vsyncpa [#allocation5], 0
    // Predicated region
    $region2: #{tpu_custom_call.1} parent=1 // pred_check
      _
    $region3: #{tpu_custom_call.1} parent=1 // pred_check_branch
      %11 = sbr.rel (0) target = $region5
    $region4: #{tpu_custom_call.1} parent=1 // pred_region
      %s12 = sadd.s32 0, 0
      %s13 = smul.u32 4, %s12
      %s14 = ssub.s32 1, %s13
      %s15 = smul.u32 2, %s14
      %s16 = ssub.s32 8, %s15
      %s17 = sshll.u32 %s16, 4
      %18 = vsyncadd [#allocation4], %s17
      %p19 = scmp.ne.s32.totalorder 0, %s15
      %s20 = smul.addr %s13, 2
      %s21 = scalar_lea.hbm %s0, %s20
      %s22 = smul.u32 2, %s14
      %s23 = sshll.u32 %s21, 4
      %s24 = int_to_ptr.hbm [resolvable:$true] %s23
      %s25 = sshll.u32 [#allocation3], 4
      %s26 = int_to_ptr.vmem [resolvable:$true] %s25
      %s27 = sshll.u32 %s22, 4
      %31 = dma.hbm_to_vmem [thread:$0]  (%p19), %s24, %s27, %s26, [#allocation4], 32, 32, 2
    $region5: #{tpu_custom_call.1} parent=1 // pred_fallthru
      _
    // Predicated region
    $region6: #{tpu_custom_call.1} parent=1 // pred_check
      _
    $region7: #{tpu_custom_call.1} parent=1 // pred_check_branch
      %33 = sbr.rel (0) target = $region9
    $region8: #{tpu_custom_call.1} parent=1 // pred_region
      %s34 = sadd.s32 0, 0
      %s35 = smul.u32 4, %s34
      %s36 = ssub.s32 1, %s35
      %s37 = smul.u32 2, %s36
      %s38 = ssub.s32 8, %s37
      %s39 = sshll.u32 %s38, 4
      %40 = vsyncadd [#allocation7], %s39
      %p41 = scmp.ne.s32.totalorder 0, %s37
      %s42 = smul.addr %s35, 2
      %s43 = scalar_lea.hbm %s1, %s42
      %s44 = smul.u32 2, %s36
      %s45 = sshll.u32 %s43, 4
      %s46 = int_to_ptr.hbm [resolvable:$true] %s45
      %s47 = sshll.u32 [#allocation6], 4
      %s48 = int_to_ptr.vmem [resolvable:$true] %s47
      %s49 = sshll.u32 %s44, 4
      %53 = dma.hbm_to_vmem [thread:$0]  (%p41), %s46, %s49, %s48, [#allocation7], 32, 32, 2
    $region9: #{tpu_custom_call.1} parent=1 // pred_fallthru
      _
    // Predicated region
    $region10: #{tpu_custom_call.1} parent=1 // pred_check
      _
    $region11: #{tpu_custom_call.1} parent=1 // pred_check_branch
      %55 = sbr.rel (0) target = $region13
    $region12: #{tpu_custom_call.1} parent=1 // pred_region
      %57 = dma.done [#allocation4], 128
    $region13: #{tpu_custom_call.1} parent=1 // pred_fallthru
      _
    // Predicated region
    $region14: #{tpu_custom_call.1} parent=1 // pred_check
      _
    $region15: #{tpu_custom_call.1} parent=1 // pred_check_branch
      %59 = sbr.rel (0) target = $region17
    $region16: #{tpu_custom_call.1} parent=1 // pred_region
      %61 = dma.done [#allocation7], 128
    $region17: #{tpu_custom_call.1} parent=1 // pred_fallthru
      _
    %s62 = sadd.s32 0, 0
    %s63 = smul.u32 4, %s62
    %s64 = ssub.s32 1, %s63
    %s65 = smul.u32 2, %s64
    %s66 = sadd.s32 0, 0
    %s67 = smul.u32 4, %s66
    %s68 = ssub.s32 1, %s67
    %s69 = smul.u32 2, %s68
    %p70 = scmp.eq.s32.totalorder 0, 0
    // Predicated region
    $region18: #{tpu_custom_call.1} parent=1 // pred_check
      %p71 = pneg %p70
    $region19: #{tpu_custom_call.1} parent=1 // pred_check_branch
      %73 = sbr.rel (%p71) target = $region21
    $region20: #{tpu_custom_call.1} parent=1 // pred_region
      %74 = vst [vmem:[#allocation2] sm:$0xff] 0.0
    $region21: #{tpu_custom_call.1} parent=1 // pred_fallthru
      _
    %v75 = vld [vmem:[#allocation3] sm:$0xff]
    %v76 = vld [vmem:[#allocation6] sm:$0xff]
    %v77 = vadd.f32 %v76, 1.0
    %v78 = vmul.f32 %v75, %v75
    %v79 = vsub.f32 %v77, %v78
    %v80 = vmul.f32 %v76, 1.442695
    %v81 = vpow.pop %v80
    %v82 = vsub.f32 %v79, %v81
    %s83 = sadd.s32 0, 0
    %v84 = vlaneseq
    %v85 = vshrl.u32 %v84, 7
    %v86 = vlaneseq
    %v87 = vand.u32 %v86, 127
    %s88 = smul.u32 %s83, 8
    %v89 = vstv %s88
    %v90 = vadd.s32 %v89, %v85
    %v91 = vmul.u32 %v90, 128
    %v92 = vadd.s32 %v91, %v87
    %vm93 = vcmp.lt.s32.totalorder %v92, 256
    %v94 = vsel %vm93, %v82, 0.0
    %v95 = vld [vmem:[#allocation2] sm:$0xff]
    %v96 = vadd.f32 %v94, 0.0
    %v97 = vadd.f32 %v95, %v96
    %98 = vst [vmem:[#allocation2] sm:$0xff] %v97
    // Predicated region
    $region22: #{tpu_custom_call.1} parent=1 // pred_check
      %p99 = pneg %p70
    $region23: #{tpu_custom_call.1} parent=1 // pred_check_branch
      %101 = sbr.rel (%p99) target = $region25
    $region24: #{tpu_custom_call.1} parent=1 // pred_region
      %v102 = vld [vmem:[#allocation2] sm:$0xff]
      %103 = vst [vmem:[#allocation8] sm:$0xff] %v102
    $region25: #{tpu_custom_call.1} parent=1 // pred_fallthru
      _
    // Predicated region
    $region26: #{tpu_custom_call.1} parent=1 // pred_check
      _
    $region27: #{tpu_custom_call.1} parent=1 // pred_check_branch
      %105 = sbr.rel (0) target = $region29
    $region28: #{tpu_custom_call.1} parent=1 // pred_region
      %107 = vsyncadd [#allocation5], 0
      %s109 = sshll.u32 [#allocation8], 4
      %s110 = int_to_ptr.vmem [resolvable:$true] %s109
      %s111 = sshll.u32 %s2, 4
      %s112 = int_to_ptr.hbm [resolvable:$true] %s111
      %114 = dma.vmem_to_hbm [thread:$0]  %s110, 128, %s112, [#allocation5]
    $region29: #{tpu_custom_call.1} parent=1 // pred_fallthru
      _
    // Predicated region
    $region30: #{tpu_custom_call.1} parent=1 // pred_check
      _
    $region31: #{tpu_custom_call.1} parent=1 // pred_check_branch
      %116 = sbr.rel (0) target = $region33
    $region32: #{tpu_custom_call.1} parent=1 // pred_region
      %118 = dma.done [#allocation5], 128
    $region33: #{tpu_custom_call.1} parent=1 // pred_fallthru
      _
    %119 = vsyncpa [#allocation4], 1
    %120 = vsyncpa [#allocation7], 1
    %121 = vsyncpa [#allocation5], 1

</llo_original>
